<compile_context>
chip_gen: v6e
topology: v6e:2x2x1
jax: 0.10.0
libtpu: 0.0.40
codegen_flags: <defaults>
</compile_context>

<pallas_src>
import numpy as np

import jax
import jax.numpy as jnp
from jax import lax
from jax.experimental import pallas as pl
from jax.experimental.pallas import tpu as pltpu


# --------------------------------------------------------------------------
# Kernel
# --------------------------------------------------------------------------
def _basic_block_kernel(x_ref, t1_ref, b1_ref, t2_ref, b2_ref, o_ref):
    """Fused conv3x3+bn1+softplus -> conv3x3+bn2+residual+softplus.

    Layout: one 2-D tile of shape (H, L) with L = N*W*C = 128 lanes (images
    packed side-by-side along lanes).  The fused weight t*_ref (3*L, L)
    realizes the three width taps, the width zero-padding, the per-image
    block-diagonal structure and the folded BN scale; the three row taps are
    built with pltpu.roll (+ zero mask on the wrapped row) and concatenated
    along K, so each conv is a single MXU matmul.
    """
    H, L = x_ref.shape

    x = x_ref[...]                                          # (H, L) f32
    row = lax.broadcasted_iota(jnp.int32, (H, L), 0)

    def row_taps(v):
        # [row-1 | row | row+1] concatenated along lanes -> (H, 3*L) bf16.
        up = jnp.where(row == 0, 0.0, pltpu.roll(v, shift=1, axis=0))
        dn = jnp.where(row == H - 1, 0.0, pltpu.roll(v, shift=H - 1, axis=0))
        return jnp.concatenate([up, v, dn], axis=1).astype(jnp.bfloat16)

    # ---- conv1 (+ folded bn1 scale): one K=3*L matmul, bias + softplus -----
    a1 = jnp.logaddexp(
        0.0,
        jnp.dot(row_taps(x), t1_ref[...], preferred_element_type=jnp.float32)
        + b1_ref[...])

    # ---- conv2 (+ folded bn2 scale) + bn2 bias + residual + softplus -------
    y2 = (jnp.dot(row_taps(a1), t2_ref[...], preferred_element_type=jnp.float32)
          + b2_ref[...] + x)                                # residual in f32
    o_ref[...] = jnp.logaddexp(0.0, y2).astype(o_ref.dtype)


# --------------------------------------------------------------------------
# Host-side prep (runs once per parameter set)
# --------------------------------------------------------------------------
def _fold_bn(gamma, beta, mean, var, eps=1e-5):
    scale = gamma / jnp.sqrt(var + eps)
    bias = beta - mean * scale
    return scale.astype(jnp.float32), bias.astype(jnp.float32)


def _fused_weights(w_oihw, scale, n_img, W):
    """3x3 OIHW conv weight (+ folded BN scale) -> (3*n*W*Cin, n*W*Cout) bf16.

    Within one image block:
      t[kh, w_in*Cin+ci, w_out*Cout+co] = scale[co] * w[co, ci, kh, kw]
        with kw = w_in - w_out + 1 if it lies in {0, 1, 2}, else 0
    (block-tridiagonal over width; realizes the conv's width zero-padding).
    Images are block-diagonal (lane packing n*W*C + w*C + c); the three row
    taps are stacked along K to match the kernel's lane-concatenated LHS.
    """
    Cout, Cin, KH, KW = w_oihw.shape
    wf = jnp.transpose(w_oihw, (2, 3, 1, 0)) * scale[None, None, None, :]
    w_in = np.arange(W)[None, :, None]
    w_out = np.arange(W)[None, None, :]
    kw = np.arange(KW)[:, None, None]
    ind = jnp.asarray((w_in == w_out + kw - 1).astype(np.float32))   # (KW,W,W)
    t = jnp.einsum('kpq,hkio->hpiqo', ind, wf.astype(jnp.float32))
    t = t.reshape(KH, W * Cin, W * Cout)
    eye = jnp.eye(n_img, dtype=jnp.float32)
    tb = jnp.einsum('nm,hpq->hnpmq', eye, t).reshape(
        KH, n_img * W * Cin, n_img * W * Cout)
    return tb.reshape(KH * n_img * W * Cin, n_img * W * Cout).astype(jnp.bfloat16)


def make_basic_block(params, n_img, C, H, W):
    """Precompute fused weights/biases once; return a jitted apply(x_nchw)."""
    Cout = params["conv1_w"].shape[0]
    assert Cout == C, "stride=1 / no-downsample BasicBlock needs planes==inplanes"

    s1, b1 = _fold_bn(*params["bn1"])
    s2, b2 = _fold_bn(*params["bn2"])
    t1 = _fused_weights(params["conv1_w"], s1, n_img, W)      # (3*L, L) bf16
    t2 = _fused_weights(params["conv2_w"], s2, n_img, W)
    L = n_img * W * Cout                                       # 2*16*4 = 128
    b1t = jnp.tile(b1, n_img * W).reshape(1, L)                # lane n*W*C+w*C+c
    b2t = jnp.tile(b2, n_img * W).reshape(1, L)

    call = pl.pallas_call(
        _basic_block_kernel,
        out_shape=jax.ShapeDtypeStruct((H, L), jnp.float32),
        grid=(1,),                       # whole (tiny) batch in one grid step
        in_specs=[
            pl.BlockSpec((H, L), lambda i: (0, 0)),
            pl.BlockSpec((3 * L, L), lambda i: (0, 0)),
            pl.BlockSpec((1, L), lambda i: (0, 0)),
            pl.BlockSpec((3 * L, L), lambda i: (0, 0)),
            pl.BlockSpec((1, L), lambda i: (0, 0)),
        ],
        out_specs=pl.BlockSpec((H, L), lambda i: (0, 0)),
        compiler_params=pltpu.CompilerParams(
            dimension_semantics=("arbitrary",)),
    )

    @jax.jit
    def apply(x_nchw):
        # NCHW -> lane-packed (H, n*W*C): images side-by-side along lanes.
        x2 = jnp.transpose(x_nchw, (2, 0, 3, 1)).reshape(H, L)
        out2 = call(x2, t1, b1t, t2, b2t)
        return jnp.transpose(out2.reshape(H, n_img, W, Cout), (1, 3, 0, 2))

    return apply


# --------------------------------------------------------------------------
# Pure-JAX reference (for sanity check)
# --------------------------------------------------------------------------
def _ref_forward(x_nchw, params):
    def conv(x, w_oihw):
        return lax.conv_general_dilated(
            x, w_oihw, window_strides=(1, 1), padding=((1, 1), (1, 1)),
            dimension_numbers=("NCHW", "OIHW", "NCHW"))

    def bn(x, gamma, beta, mean, var, eps=1e-5):
        sh = (1, -1, 1, 1)
        return (x - mean.reshape(sh)) / jnp.sqrt(var.reshape(sh) + eps) \
            * gamma.reshape(sh) + beta.reshape(sh)

    act = lambda v: jnp.logaddexp(0.0, v)
    out = act(bn(conv(x_nchw, params["conv1_w"]), *params["bn1"]))
    out = bn(conv(out, params["conv2_w"]), *params["bn2"])
    return act(out + x_nchw)


# --------------------------------------------------------------------------
# Main
# --------------------------------------------------------------------------
if __name__ == "__main__":
    key = jax.random.PRNGKey(0)
    N, C, H, W = 2, 4, 16, 16          # inplanes == planes == 4, stride == 1
    kx, k1, k2, kg1, kb1, km1, kv1, kg2, kb2, km2, kv2 = jax.random.split(key, 11)

    x = jax.random.normal(kx, (N, C, H, W), jnp.float32)
    params = {
        "conv1_w": jax.random.normal(k1, (C, C, 3, 3), jnp.float32) * 0.1,
        "conv2_w": jax.random.normal(k2, (C, C, 3, 3), jnp.float32) * 0.1,
        "bn1": (jax.random.normal(kg1, (C,)) * 0.1 + 1.0,                # gamma
                jax.random.normal(kb1, (C,)) * 0.1,                       # beta
                jax.random.normal(km1, (C,)) * 0.1,                       # mean
                jax.random.uniform(kv1, (C,), minval=0.5, maxval=1.5)),   # var
        "bn2": (jax.random.normal(kg2, (C,)) * 0.1 + 1.0,
                jax.random.normal(kb2, (C,)) * 0.1,
                jax.random.normal(km2, (C,)) * 0.1,
                jax.random.uniform(kv2, (C,), minval=0.5, maxval=1.5)),
    }

    block = make_basic_block(params, N, C, H, W)   # prep hoisted out of hot path
    out = block(x)
    jax.block_until_ready(out)

    ref = _ref_forward(x, params)
    assert out.shape == (N, C, H, W)
    # bf16 MXU operands (f32 accumulation) through two convs => loose tolerance.
    assert jnp.allclose(out, ref, atol=5e-2, rtol=5e-2), "mismatch vs reference"

    print("KERNEL_OK")
</pallas_src>

<mosaic_0001>
module attributes {stable_mosaic.version = 11 : i64} {
  func.func @_basic_block_kernel(%arg0: i32, %arg1: memref<16x128xf32, #tpu.memory_space<vmem>>, %arg2: memref<384x128xbf16, #tpu.memory_space<vmem>>, %arg3: memref<1x128xf32, #tpu.memory_space<vmem>>, %arg4: memref<384x128xbf16, #tpu.memory_space<vmem>>, %arg5: memref<1x128xf32, #tpu.memory_space<vmem>>, %arg6: memref<16x128xf32, #tpu.memory_space<vmem>>) attributes {dimension_semantics = [#tpu.dimension_semantics<arbitrary>], iteration_bounds = array<i64: 1>, scalar_prefetch = 0 : i64, scratch_operands = 0 : i64, tpu.core_type = #tpu.core_type<tc>, window_params = [{pipeline_mode = #tpu.pipeline_mode<synchronous>, transform_indices = @transform_0, window_bounds = array<i64: 16, 128>}, {pipeline_mode = #tpu.pipeline_mode<synchronous>, transform_indices = @transform_1, window_bounds = array<i64: 384, 128>}, {pipeline_mode = #tpu.pipeline_mode<synchronous>, transform_indices = @transform_2, window_bounds = array<i64: 1, 128>}, {pipeline_mode = #tpu.pipeline_mode<synchronous>, transform_indices = @transform_3, window_bounds = array<i64: 384, 128>}, {pipeline_mode = #tpu.pipeline_mode<synchronous>, transform_indices = @transform_4, window_bounds = array<i64: 1, 128>}, {pipeline_mode = #tpu.pipeline_mode<synchronous>, transform_indices = @transform_5, window_bounds = array<i64: 16, 128>}]} {
    %c0 = arith.constant 0 : index
    %c0_0 = arith.constant 0 : index
    %0 = vector.load %arg1[%c0, %c0_0] : memref<16x128xf32, #tpu.memory_space<vmem>>, vector<16x128xf32>
    %1 = tpu.iota {dimensions = array<i32: 0>} : vector<16x128xi32>
    %c0_i32 = arith.constant 0 : i32
    %2 = vector.broadcast %c0_i32 : i32 to vector<16x128xi32>
    %3 = arith.cmpi eq, %1, %2 : vector<16x128xi32>
    %c1_i32 = arith.constant 1 : i32
    %4 = tpu.dynamic_rotate %0 by %c1_i32 dim 0 : vector<16x128xf32>, i32 -> vector<16x128xf32>
    %cst = arith.constant 0.000000e+00 : f32
    %5 = vector.broadcast %cst : f32 to vector<16x128xf32>
    %6 = arith.select %3, %5, %4 : vector<16x128xi1>, vector<16x128xf32>
    %c15_i32 = arith.constant 15 : i32
    %7 = vector.broadcast %c15_i32 : i32 to vector<16x128xi32>
    %8 = arith.cmpi eq, %1, %7 : vector<16x128xi32>
    %c15_i32_1 = arith.constant 15 : i32
    %9 = tpu.dynamic_rotate %0 by %c15_i32_1 dim 0 : vector<16x128xf32>, i32 -> vector<16x128xf32>
    %cst_2 = arith.constant 0.000000e+00 : f32
    %10 = vector.broadcast %cst_2 : f32 to vector<16x128xf32>
    %11 = arith.select %8, %10, %9 : vector<16x128xi1>, vector<16x128xf32>
    %12 = tpu.concatenate %6, %0, %11 in 1 : vector<16x128xf32>, vector<16x128xf32>, vector<16x128xf32> -> vector<16x384xf32>
    %13 = arith.truncf %12 : vector<16x384xf32> to vector<16x384xbf16>
    %c0_3 = arith.constant 0 : index
    %c0_4 = arith.constant 0 : index
    %14 = vector.load %arg2[%c0_3, %c0_4] : memref<384x128xbf16, #tpu.memory_space<vmem>>, vector<384x128xbf16>
    %cst_5 = arith.constant dense<0.000000e+00> : vector<16x128xf32>
    %15 = tpu.matmul %13, %14, %cst_5 {dimension_numbers = #tpu.dot_dimension_numbers<[1], [0], [0], [1], [0, 0, 1, 1], [], []>} : vector<16x384xbf16>, vector<384x128xbf16>, vector<16x128xf32> -> vector<16x128xf32>
    %c0_6 = arith.constant 0 : index
    %c0_7 = arith.constant 0 : index
    %16 = vector.load %arg3[%c0_6, %c0_7] : memref<1x128xf32, #tpu.memory_space<vmem>>, vector<1x128xf32>
    %17 = vector.broadcast %16 : vector<1x128xf32> to vector<16x128xf32>
    %18 = arith.addf %15, %17 : vector<16x128xf32>
    %cst_8 = arith.constant 0.000000e+00 : f32
    %19 = vector.broadcast %cst_8 : f32 to vector<16x128xf32>
    %20 = arith.maximumf %19, %18 : vector<16x128xf32>
    %21 = vector.broadcast %cst_8 : f32 to vector<16x128xf32>
    %22 = arith.subf %21, %18 : vector<16x128xf32>
    %23 = arith.cmpf one, %22, %22 : vector<16x128xf32>
    %24 = vector.broadcast %cst_8 : f32 to vector<16x128xf32>
    %25 = arith.addf %24, %18 : vector<16x128xf32>
    %26 = math.absf %22 : vector<16x128xf32>
    %cst_9 = arith.constant 0.000000e+00 : f32
    %27 = vector.broadcast %cst_9 : f32 to vector<16x128xf32>
    %28 = arith.subf %27, %26 : vector<16x128xf32>
    %29 = math.exp %28 : vector<16x128xf32>
    %30 = math.log1p %29 : vector<16x128xf32>
    %31 = arith.addf %20, %30 : vector<16x128xf32>
    %32 = arith.select %23, %25, %31 : vector<16x128xi1>, vector<16x128xf32>
    %c0_i32_10 = arith.constant 0 : i32
    %33 = vector.broadcast %c0_i32_10 : i32 to vector<16x128xi32>
    %34 = arith.cmpi eq, %1, %33 : vector<16x128xi32>
    %c1_i32_11 = arith.constant 1 : i32
    %35 = tpu.dynamic_rotate %32 by %c1_i32_11 dim 0 : vector<16x128xf32>, i32 -> vector<16x128xf32>
    %cst_12 = arith.constant 0.000000e+00 : f32
    %36 = vector.broadcast %cst_12 : f32 to vector<16x128xf32>
    %37 = arith.select %34, %36, %35 : vector<16x128xi1>, vector<16x128xf32>
    %c15_i32_13 = arith.constant 15 : i32
    %38 = vector.broadcast %c15_i32_13 : i32 to vector<16x128xi32>
    %39 = arith.cmpi eq, %1, %38 : vector<16x128xi32>
    %c15_i32_14 = arith.constant 15 : i32
    %40 = tpu.dynamic_rotate %32 by %c15_i32_14 dim 0 : vector<16x128xf32>, i32 -> vector<16x128xf32>
    %cst_15 = arith.constant 0.000000e+00 : f32
    %41 = vector.broadcast %cst_15 : f32 to vector<16x128xf32>
    %42 = arith.select %39, %41, %40 : vector<16x128xi1>, vector<16x128xf32>
    %43 = tpu.concatenate %37, %32, %42 in 1 : vector<16x128xf32>, vector<16x128xf32>, vector<16x128xf32> -> vector<16x384xf32>
    %44 = arith.truncf %43 : vector<16x384xf32> to vector<16x384xbf16>
    %c0_16 = arith.constant 0 : index
    %c0_17 = arith.constant 0 : index
    %45 = vector.load %arg4[%c0_16, %c0_17] : memref<384x128xbf16, #tpu.memory_space<vmem>>, vector<384x128xbf16>
    %cst_18 = arith.constant dense<0.000000e+00> : vector<16x128xf32>
    %46 = tpu.matmul %44, %45, %cst_18 {dimension_numbers = #tpu.dot_dimension_numbers<[1], [0], [0], [1], [0, 0, 1, 1], [], []>} : vector<16x384xbf16>, vector<384x128xbf16>, vector<16x128xf32> -> vector<16x128xf32>
    %c0_19 = arith.constant 0 : index
    %c0_20 = arith.constant 0 : index
    %47 = vector.load %arg5[%c0_19, %c0_20] : memref<1x128xf32, #tpu.memory_space<vmem>>, vector<1x128xf32>
    %48 = vector.broadcast %47 : vector<1x128xf32> to vector<16x128xf32>
    %49 = arith.addf %46, %48 : vector<16x128xf32>
    %50 = arith.addf %49, %0 : vector<16x128xf32>
    %cst_21 = arith.constant 0.000000e+00 : f32
    %51 = vector.broadcast %cst_21 : f32 to vector<16x128xf32>
    %52 = arith.maximumf %51, %50 : vector<16x128xf32>
    %53 = vector.broadcast %cst_21 : f32 to vector<16x128xf32>
    %54 = arith.subf %53, %50 : vector<16x128xf32>
    %55 = arith.cmpf one, %54, %54 : vector<16x128xf32>
    %56 = vector.broadcast %cst_21 : f32 to vector<16x128xf32>
    %57 = arith.addf %56, %50 : vector<16x128xf32>
    %58 = math.absf %54 : vector<16x128xf32>
    %cst_22 = arith.constant 0.000000e+00 : f32
    %59 = vector.broadcast %cst_22 : f32 to vector<16x128xf32>
    %60 = arith.subf %59, %58 : vector<16x128xf32>
    %61 = math.exp %60 : vector<16x128xf32>
    %62 = math.log1p %61 : vector<16x128xf32>
    %63 = arith.addf %52, %62 : vector<16x128xf32>
    %64 = arith.select %55, %57, %63 : vector<16x128xi1>, vector<16x128xf32>
    %c0_23 = arith.constant 0 : index
    %c0_24 = arith.constant 0 : index
    %65 = vector.load %arg6[%c0_23, %c0_24] : memref<16x128xf32, #tpu.memory_space<vmem>>, vector<16x128xf32>
    tpu.vector_store %arg6[%c0_23, %c0_24], %64 {strides = array<i32>} : memref<16x128xf32, #tpu.memory_space<vmem>>, vector<16x128xf32>,
    return
  }
  func.func @transform_0(%arg0: i32) -> (i32, i32) {
    %c0_i32 = arith.constant 0 : i32
    %c0_i32_0 = arith.constant 0 : i32
    %c0_i32_1 = arith.constant 0 : i32
    return %c0_i32, %c0_i32_0 : i32, i32
  }
  func.func @transform_1(%arg0: i32) -> (i32, i32) {
    %c0_i32 = arith.constant 0 : i32
    %c0_i32_0 = arith.constant 0 : i32
    %c0_i32_1 = arith.constant 0 : i32
    return %c0_i32, %c0_i32_0 : i32, i32
  }
  func.func @transform_2(%arg0: i32) -> (i32, i32) {
    %c0_i32 = arith.constant 0 : i32
    %c0_i32_0 = arith.constant 0 : i32
    %c0_i32_1 = arith.constant 0 : i32
    return %c0_i32, %c0_i32_0 : i32, i32
  }
  func.func @transform_3(%arg0: i32) -> (i32, i32) {
    %c0_i32 = arith.constant 0 : i32
    %c0_i32_0 = arith.constant 0 : i32
    %c0_i32_1 = arith.constant 0 : i32
    return %c0_i32, %c0_i32_0 : i32, i32
  }
  func.func @transform_4(%arg0: i32) -> (i32, i32) {
    %c0_i32 = arith.constant 0 : i32
    %c0_i32_0 = arith.constant 0 : i32
    %c0_i32_1 = arith.constant 0 : i32
    return %c0_i32, %c0_i32_0 : i32, i32
  }
  func.func @transform_5(%arg0: i32) -> (i32, i32) {
    %c0_i32 = arith.constant 0 : i32
    %c0_i32_0 = arith.constant 0 : i32
    %c0_i32_1 = arith.constant 0 : i32
    return %c0_i32, %c0_i32_0 : i32, i32
  }
}

</mosaic_0001>

<llo_original>
// kernel: apply.1
$region0: #{apply.1}
  #allocation0 [shape = 'u32[]', space=smem, size = 0x4, offset = 0x4, fixed_abs, tag = 'smem constant byte address 0x4 - core index']
  #allocation1 [shape = 'u32[144,128]{1,0:T(1,128)}', space=vmem, size = 0x12000, scoped, tag = 'internal scratch']
  %s0 = inlined_call_operand.vmem [shape: f32[16,128], index: 0, kind: input, shape index: {}]
  %s1 = inlined_call_operand.vmem [shape: bf16[384,128], index: 1, kind: input, shape index: {}]
  %s2 = inlined_call_operand.vmem [shape: f32[1,128], index: 2, kind: input, shape index: {}]
  %s3 = inlined_call_operand.vmem [shape: bf16[384,128], index: 3, kind: input, shape index: {}]
  %s4 = inlined_call_operand.vmem [shape: f32[1,128], index: 4, kind: input, shape index: {}]
  %s5 = inlined_call_operand.vmem [shape: f32[16,128], index: 5, kind: output, shape index: {}]
  %s6 = sld [smem:[#allocation0]]
  $region30: #{apply.1} parent=0
    _
  %s8 = ssub.s32 1, %s6
  %s9 = scalar_select 0, %s8, %s6
  // Predicated region
  $region2: #{apply.1} parent=0 // pred_check
    _
  $region3: #{apply.1} parent=0 // pred_check_branch
    %11 = sbr.rel (0) target = $region5
  $region4: #{apply.1} parent=0 // pred_region
    _
  $region5: #{apply.1} parent=0 // pred_fallthru
    _
  // Predicated region
  $region6: #{apply.1} parent=0 // pred_check
    _
  $region7: #{apply.1} parent=0 // pred_check_branch
    %13 = sbr.rel (0) target = $region9
  $region8: #{apply.1} parent=0 // pred_region
    _
  $region9: #{apply.1} parent=0 // pred_fallthru
    _
  // Predicated region
  $region10: #{apply.1} parent=0 // pred_check
    _
  $region11: #{apply.1} parent=0 // pred_check_branch
    %15 = sbr.rel (0) target = $region13
  $region12: #{apply.1} parent=0 // pred_region
    _
  $region13: #{apply.1} parent=0 // pred_fallthru
    _
  // Predicated region
  $region14: #{apply.1} parent=0 // pred_check
    _
  $region15: #{apply.1} parent=0 // pred_check_branch
    %17 = sbr.rel (0) target = $region17
  $region16: #{apply.1} parent=0 // pred_region
    _
  $region17: #{apply.1} parent=0 // pred_fallthru
    _
  // Predicated region
  $region18: #{apply.1} parent=0 // pred_check
    _
  $region19: #{apply.1} parent=0 // pred_check_branch
    %19 = sbr.rel (0) target = $region21
  $region20: #{apply.1} parent=0 // pred_region
    _
  $region21: #{apply.1} parent=0 // pred_fallthru
    _
  %v21 = vld [vmem:[%s0] sm:$0xff]
  %v22 = vld [vmem:[%s0 + $0x8] sm:$0xff]
  %v23 = vlaneseq
  %v24 = vshrl.u32 %v23, 7
  %v25 = vadd.s32 %v24, 8
  %vm26 = vcmp.eq.s32.totalorder %v24, 0
  %vm27 = vcmp.eq.s32.totalorder %v25, 0
  %v28 = vrot.slane %v21, 7
  %v29 = vrot.slane %v22, 7
  %vm30 = vcmp.lt.s32.totalorder %v24, 1
  %v31 = vsel %vm30, %v28, %v29
  %v32 = vsel %vm30, %v29, %v28
  %v33 = vsel %vm26, 0.0, %v32
  %v34 = vsel %vm27, 0.0, %v31
  %vm35 = vcmp.eq.s32.totalorder %v24, 15
  %vm36 = vcmp.eq.s32.totalorder %v25, 15
  %v37 = vrot.slane %v21, 1
  %v38 = vrot.slane %v22, 1
  %vm39 = vcmp.lt.s32.totalorder %v24, 7
  %v40 = vsel %vm39, %v37, %v38
  %v41 = vsel %vm39, %v38, %v37
  %v42 = vsel %vm35, 0.0, %v40
  %v43 = vsel %vm36, 0.0, %v41
  %v44 = vpack.c.bf16 %v34, %v33
  %v45 = vpack.c.bf16 %v22, %v21
  %v46 = vpack.c.bf16 %v43, %v42
  %v47 = vld [vmem:[%s1] sm:$0xf]
  %v48 = vld [vmem:[%s1 + $0x4] sm:$0xf]
  %v49 = vld [vmem:[%s1 + $0x8] sm:$0xf]
  %v50 = vld [vmem:[%s1 + $0xc] sm:$0xf]
  %v51 = vld [vmem:[%s1 + $0x10] sm:$0xf]
  %v52 = vld [vmem:[%s1 + $0x14] sm:$0xf]
  %v53 = vld [vmem:[%s1 + $0x18] sm:$0xf]
  %v54 = vld [vmem:[%s1 + $0x1c] sm:$0xf]
  %v55 = vld [vmem:[%s1 + $0x20] sm:$0xf]
  %v56 = vld [vmem:[%s1 + $0x24] sm:$0xf]
  %v57 = vld [vmem:[%s1 + $0x28] sm:$0xf]
  %v58 = vld [vmem:[%s1 + $0x2c] sm:$0xf]
  %v59 = vld [vmem:[%s1 + $0x30] sm:$0xf]
  %v60 = vld [vmem:[%s1 + $0x34] sm:$0xf]
  %v61 = vld [vmem:[%s1 + $0x38] sm:$0xf]
  %v62 = vld [vmem:[%s1 + $0x3c] sm:$0xf]
  %v63 = vld [vmem:[%s1 + $0x40] sm:$0xf]
  %v64 = vld [vmem:[%s1 + $0x44] sm:$0xf]
  %v65 = vld [vmem:[%s1 + $0x48] sm:$0xf]
  %v66 = vld [vmem:[%s1 + $0x4c] sm:$0xf]
  %v67 = vld [vmem:[%s1 + $0x50] sm:$0xf]
  %v68 = vld [vmem:[%s1 + $0x54] sm:$0xf]
  %v69 = vld [vmem:[%s1 + $0x58] sm:$0xf]
  %v70 = vld [vmem:[%s1 + $0x5c] sm:$0xf]
  %v71 = vld [vmem:[%s1 + $0x60] sm:$0xf]
  %v72 = vld [vmem:[%s1 + $0x64] sm:$0xf]
  %v73 = vld [vmem:[%s1 + $0x68] sm:$0xf]
  %v74 = vld [vmem:[%s1 + $0x6c] sm:$0xf]
  %v75 = vld [vmem:[%s1 + $0x70] sm:$0xf]
  %v76 = vld [vmem:[%s1 + $0x74] sm:$0xf]
  %v77 = vld [vmem:[%s1 + $0x78] sm:$0xf]
  %v78 = vld [vmem:[%s1 + $0x7c] sm:$0xf]
  %v79 = vld [vmem:[%s1 + $0x80] sm:$0xf]
  %v80 = vld [vmem:[%s1 + $0x84] sm:$0xf]
  %v81 = vld [vmem:[%s1 + $0x88] sm:$0xf]
  %v82 = vld [vmem:[%s1 + $0x8c] sm:$0xf]
  %v83 = vld [vmem:[%s1 + $0x90] sm:$0xf]
  %v84 = vld [vmem:[%s1 + $0x94] sm:$0xf]
  %v85 = vld [vmem:[%s1 + $0x98] sm:$0xf]
  %v86 = vld [vmem:[%s1 + $0x9c] sm:$0xf]
  %v87 = vld [vmem:[%s1 + $0xa0] sm:$0xf]
  %v88 = vld [vmem:[%s1 + $0xa4] sm:$0xf]
  %v89 = vld [vmem:[%s1 + $0xa8] sm:$0xf]
  %v90 = vld [vmem:[%s1 + $0xac] sm:$0xf]
  %v91 = vld [vmem:[%s1 + $0xb0] sm:$0xf]
  %v92 = vld [vmem:[%s1 + $0xb4] sm:$0xf]
  %v93 = vld [vmem:[%s1 + $0xb8] sm:$0xf]
  %v94 = vld [vmem:[%s1 + $0xbc] sm:$0xf]
  %v95 = vld [vmem:[%s2] sm:$0x1]
  %v97 = vlaneseq
  %v98 = vshrl.u32 %v97, 7
  %v99 = vsub.s32 0, %v98
  %v100 = vrot.slane %v95, %v99
  %v150 = vunpack.c.l.b16 %v47
  %v151 = vunpack.c.l.b16 %v48
  %v152 = vunpack.c.l.b16 %v49
  %v153 = vunpack.c.l.b16 %v50
  %v154 = vunpack.c.l.b16 %v51
  %v155 = vunpack.c.l.b16 %v52
  %v156 = vunpack.c.l.b16 %v53
  %v157 = vunpack.c.l.b16 %v54
  %v158 = vunpack.c.l.b16 %v55
  %v159 = vunpack.c.l.b16 %v56
  %v160 = vunpack.c.l.b16 %v57
  %v161 = vunpack.c.l.b16 %v58
  %v162 = vunpack.c.l.b16 %v59
  %v163 = vunpack.c.l.b16 %v60
  %v164 = vunpack.c.l.b16 %v61
  %v165 = vunpack.c.l.b16 %v62
  %v166 = vunpack.c.l.b16 %v63
  %v167 = vunpack.c.l.b16 %v64
  %v168 = vunpack.c.l.b16 %v65
  %v169 = vunpack.c.l.b16 %v66
  %v170 = vunpack.c.l.b16 %v67
  %v171 = vunpack.c.l.b16 %v68
  %v172 = vunpack.c.l.b16 %v69
  %v173 = vunpack.c.l.b16 %v70
  %v174 = vunpack.c.l.b16 %v71
  %v175 = vunpack.c.l.b16 %v72
  %v176 = vunpack.c.l.b16 %v73
  %v177 = vunpack.c.l.b16 %v74
  %v178 = vunpack.c.l.b16 %v75
  %v179 = vunpack.c.l.b16 %v76
  %v180 = vunpack.c.l.b16 %v77
  %v181 = vunpack.c.l.b16 %v78
  %v182 = vunpack.c.l.b16 %v79
  %v183 = vunpack.c.l.b16 %v80
  %v184 = vunpack.c.l.b16 %v81
  %v185 = vunpack.c.l.b16 %v82
  %v186 = vunpack.c.l.b16 %v83
  %v187 = vunpack.c.l.b16 %v84
  %v188 = vunpack.c.l.b16 %v85
  %v189 = vunpack.c.l.b16 %v86
  %v190 = vunpack.c.l.b16 %v87
  %v191 = vunpack.c.l.b16 %v88
  %v192 = vunpack.c.l.b16 %v89
  %v193 = vunpack.c.l.b16 %v90
  %v194 = vunpack.c.l.b16 %v91
  %v195 = vunpack.c.l.b16 %v92
  %v196 = vunpack.c.l.b16 %v93
  %v197 = vunpack.c.l.b16 %v94
  %v198 = vpack.c.b16 %v151, %v150
  %v199 = vpack.c.b16 %v153, %v152
  %v200 = vpack.c.b16 %v155, %v154
  %v201 = vpack.c.b16 %v157, %v156
  %v202 = vpack.c.b16 %v159, %v158
  %v203 = vpack.c.b16 %v161, %v160
  %v204 = vpack.c.b16 %v163, %v162
  %v205 = vpack.c.b16 %v165, %v164
  %v206 = vpack.c.b16 %v167, %v166
  %v207 = vpack.c.b16 %v169, %v168
  %v208 = vpack.c.b16 %v171, %v170
  %v209 = vpack.c.b16 %v173, %v172
  %v210 = vpack.c.b16 %v175, %v174
  %v211 = vpack.c.b16 %v177, %v176
  %v212 = vpack.c.b16 %v179, %v178
  %v213 = vpack.c.b16 %v181, %v180
  %v214 = vpack.c.b16 %v183, %v182
  %v215 = vpack.c.b16 %v185, %v184
  %v216 = vpack.c.b16 %v187, %v186
  %v217 = vpack.c.b16 %v189, %v188
  %v218 = vpack.c.b16 %v191, %v190
  %v219 = vpack.c.b16 %v193, %v192
  %v220 = vpack.c.b16 %v195, %v194
  %v221 = vpack.c.b16 %v197, %v196
  %246 = vmatprep.subr.bf16.mxu0 0
  %247 = vmatpush1.bf16.msra.mxu0 %v205
  %248 = vmatprep.subr.bf16.mxu0 0
  %249 = vmatpush1.bf16.msra.mxu0 %v204
  %250 = vmatprep.subr.bf16.mxu0 0
  %251 = vmatpush1.bf16.msra.mxu0 %v203
  %252 = vmatprep.subr.bf16.mxu0 0
  %253 = vmatpush1.bf16.msra.mxu0 %v202
  %254 = vmatprep.subr.bf16.mxu0 0
  %255 = vmatpush1.bf16.msra.mxu0 %v201
  %256 = vmatprep.subr.bf16.mxu0 0
  %257 = vmatpush1.bf16.msra.mxu0 %v200
  %258 = vmatprep.subr.bf16.mxu0 0
  %259 = vmatpush1.bf16.msra.mxu0 %v199
  %260 = vmatprep.subr.bf16.mxu0 0
  %261 = vmatpush1.bf16.msra.mxu0 %v198
  %262 = vmatprep.subr.bf16.mxu0 0
  %263 = vmatpush2.bf16.msra.mxu0 %v213
  %264 = vmatprep.subr.bf16.mxu0 0
  %265 = vmatpush2.bf16.msra.mxu0 %v212
  %266 = vmatprep.subr.bf16.mxu0 0
  %267 = vmatpush2.bf16.msra.mxu0 %v211
  %268 = vmatprep.subr.bf16.mxu0 0
  %269 = vmatpush2.bf16.msra.mxu0 %v210
  %270 = vmatprep.subr.bf16.mxu0 0
  %271 = vmatpush2.bf16.msra.mxu0 %v209
  %272 = vmatprep.subr.bf16.mxu0 0
  %273 = vmatpush2.bf16.msra.mxu0 %v208
  %274 = vmatprep.subr.bf16.mxu0 0
  %275 = vmatpush2.bf16.msra.mxu0 %v207
  %276 = vmatprep.subr.bf16.mxu0 0
  %277 = vmatpush2.bf16.msra.mxu0 %v206
  %278 = vmatprep.mubr.bf16.mxu0 %v45
  %279 = vmatmul.mubr.bf16.gmra.mxu0 %v44
  %v280 = vpop.f32.mrf.mxu0
  %v281 = vadd.f32 %v100, %v280
  %v282 = vpop.f32.mrf.mxu0
  %v283 = vpop.f32.mrf.mxu0
  %v284 = vadd.f32 %v100, %v283
  %v285 = vpop.f32.mrf.mxu0
  %286 = vdwg.mxu0
  %287 = vmatprep.subr.bf16.mxu0 0
  %288 = vmatpush1.bf16.msra.mxu0 %v221
  %289 = vmatprep.subr.bf16.mxu0 0
  %290 = vmatpush1.bf16.msra.mxu0 %v220
  %291 = vmatprep.subr.bf16.mxu0 0
  %292 = vmatpush1.bf16.msra.mxu0 %v219
  %293 = vmatprep.subr.bf16.mxu0 0
  %294 = vmatpush1.bf16.msra.mxu0 %v218
  %295 = vmatprep.subr.bf16.mxu0 0
  %296 = vmatpush1.bf16.msra.mxu0 %v217
  %297 = vmatprep.subr.bf16.mxu0 0
  %298 = vmatpush1.bf16.msra.mxu0 %v216
  %299 = vmatprep.subr.bf16.mxu0 0
  %300 = vmatpush1.bf16.msra.mxu0 %v215
  %301 = vmatprep.subr.bf16.mxu0 0
  %302 = vmatpush1.bf16.msra.mxu0 %v214
  %303 = vmatprep.subr.bf16.mxu0 0
  %304 = vmatpush2.bf16.msra.mxu0 0
  %305 = vmatprep.subr.bf16.mxu0 0
  %306 = vmatpush2.bf16.msra.mxu0 0
  %307 = vmatprep.subr.bf16.mxu0 0
  %308 = vmatpush2.bf16.msra.mxu0 0
  %309 = vmatprep.subr.bf16.mxu0 0
  %310 = vmatpush2.bf16.msra.mxu0 0
  %311 = vmatprep.subr.bf16.mxu0 0
  %312 = vmatpush2.bf16.msra.mxu0 0
  %313 = vmatprep.subr.bf16.mxu0 0
  %314 = vmatpush2.bf16.msra.mxu0 0
  %315 = vmatprep.subr.bf16.mxu0 0
  %316 = vmatpush2.bf16.msra.mxu0 0
  %317 = vmatprep.subr.bf16.mxu0 0
  %318 = vmatpush2.bf16.msra.mxu0 0
  %319 = vmatprep.mubr.bf16.mxu0 0
  %320 = vmatmul.mubr.bf16.gmra.mxu0 %v46
  %v321 = vpop.f32.mrf.mxu0
  %v322 = vadd.f32 %v281, %v321
  %v323 = vpop.f32.mrf.mxu0
  %v324 = vpop.f32.mrf.mxu0
  %v325 = vadd.f32 %v284, %v324
  %v326 = vpop.f32.mrf.mxu0
  %327 = vdwg.mxu0
  %v328 = vmax.f32 %v322, 0.0
  %v329 = vmax.f32 %v325, 0.0
  %v330 = vsub.f32 0.0, %v322
  %v331 = vsub.f32 0.0, %v325
  %vm332 = vcmp.ne.f32.partialorder %v330, %v330
  %vm333 = vcmp.ne.f32.partialorder %v331, %v331
  %v334 = vadd.f32 %v322, 0.0
  %v335 = vadd.f32 %v325, 0.0
  %v336 = vand.u32 2147483647, %v330
  %v337 = vand.u32 2147483647, %v331
  %v338 = vsub.f32 0.0, %v336
  %v339 = vsub.f32 0.0, %v337
  %v340 = vmul.f32 %v338, 1.442695
  %v341 = vpow.pop %v340
  %v342 = vmul.f32 %v339, 1.442695
  %v343 = vpow.pop %v342
  %v344 = vadd.f32 %v341, 1.0
  %v345 = vlog2.pop %v344
  %v346 = vmul.f32 %v345, 0.6931472
  %v347 = vmul.f32 -0.5, %v341
  %v348 = vadd.f32 %v347, 1.0
  %v349 = vmul.f32 %v348, %v341
  %v350 = vand.u32 2147483647, %v341
  %vm351 = vcmp.lt.f32.partialorder %v350, 0.0004427343
  %v352 = vsel %vm351, %v349, %v346
  %v353 = vadd.f32 %v343, 1.0
  %v354 = vlog2.pop %v353
  %v355 = vmul.f32 %v354, 0.6931472
  %v356 = vmul.f32 -0.5, %v343
  %v357 = vadd.f32 %v356, 1.0
  %v358 = vmul.f32 %v357, %v343
  %v359 = vand.u32 2147483647, %v343
  %vm360 = vcmp.lt.f32.partialorder %v359, 0.0004427343
  %v361 = vsel %vm360, %v358, %v355
  %v362 = vadd.f32 %v328, %v352
  %v363 = vadd.f32 %v329, %v361
  %v364 = vsel %vm332, %v334, %v362
  %v365 = vsel %vm333, %v335, %v363
  %v366 = vrot.slane %v364, 7
  %v367 = vrot.slane %v365, 7
  %v368 = vsel %vm30, %v366, %v367
  %v369 = vsel %vm30, %v367, %v366
  %v370 = vsel %vm26, 0.0, %v369
  %v371 = vsel %vm27, 0.0, %v368
  %v372 = vrot.slane %v364, 1
  %v373 = vrot.slane %v365, 1
  %v374 = vsel %vm39, %v372, %v373
  %v375 = vsel %vm39, %v373, %v372
  %v376 = vsel %vm35, 0.0, %v374
  %v377 = vsel %vm36, 0.0, %v375
  %v378 = vpack.c.bf16 %v371, %v370
  %v379 = vpack.c.bf16 %v365, %v364
  %v380 = vpack.c.bf16 %v377, %v376
  %v381 = vld [vmem:[%s3] sm:$0xf]
  %v382 = vld [vmem:[%s3 + $0x4] sm:$0xf]
  %v383 = vld [vmem:[%s3 + $0x8] sm:$0xf]
  %v384 = vld [vmem:[%s3 + $0xc] sm:$0xf]
  %v385 = vld [vmem:[%s3 + $0x10] sm:$0xf]
  %v386 = vld [vmem:[%s3 + $0x14] sm:$0xf]
  %v387 = vld [vmem:[%s3 + $0x18] sm:$0xf]
  %v388 = vld [vmem:[%s3 + $0x1c] sm:$0xf]
  %v389 = vld [vmem:[%s3 + $0x20] sm:$0xf]
  %v390 = vld [vmem:[%s3 + $0x24] sm:$0xf]
  %v391 = vld [vmem:[%s3 + $0x28] sm:$0xf]
  %v392 = vld [vmem:[%s3 + $0x2c] sm:$0xf]
  %v393 = vld [vmem:[%s3 + $0x30] sm:$0xf]
  %v394 = vld [vmem:[%s3 + $0x34] sm:$0xf]
  %v395 = vld [vmem:[%s3 + $0x38] sm:$0xf]
  %v396 = vld [vmem:[%s3 + $0x3c] sm:$0xf]
  %v397 = vld [vmem:[%s3 + $0x40] sm:$0xf]
  %v398 = vld [vmem:[%s3 + $0x44] sm:$0xf]
  %v399 = vld [vmem:[%s3 + $0x48] sm:$0xf]
  %v400 = vld [vmem:[%s3 + $0x4c] sm:$0xf]
  %v401 = vld [vmem:[%s3 + $0x50] sm:$0xf]
  %v402 = vld [vmem:[%s3 + $0x54] sm:$0xf]
  %v403 = vld [vmem:[%s3 + $0x58] sm:$0xf]
  %v404 = vld [vmem:[%s3 + $0x5c] sm:$0xf]
  %v405 = vld [vmem:[%s3 + $0x60] sm:$0xf]
  %v406 = vld [vmem:[%s3 + $0x64] sm:$0xf]
  %v407 = vld [vmem:[%s3 + $0x68] sm:$0xf]
  %v408 = vld [vmem:[%s3 + $0x6c] sm:$0xf]
  %v409 = vld [vmem:[%s3 + $0x70] sm:$0xf]
  %v410 = vld [vmem:[%s3 + $0x74] sm:$0xf]
  %v411 = vld [vmem:[%s3 + $0x78] sm:$0xf]
  %v412 = vld [vmem:[%s3 + $0x7c] sm:$0xf]
  %v413 = vld [vmem:[%s3 + $0x80] sm:$0xf]
  %v414 = vld [vmem:[%s3 + $0x84] sm:$0xf]
  %v415 = vld [vmem:[%s3 + $0x88] sm:$0xf]
  %v416 = vld [vmem:[%s3 + $0x8c] sm:$0xf]
  %v417 = vld [vmem:[%s3 + $0x90] sm:$0xf]
  %v418 = vld [vmem:[%s3 + $0x94] sm:$0xf]
  %v419 = vld [vmem:[%s3 + $0x98] sm:$0xf]
  %v420 = vld [vmem:[%s3 + $0x9c] sm:$0xf]
  %v421 = vld [vmem:[%s3 + $0xa0] sm:$0xf]
  %v422 = vld [vmem:[%s3 + $0xa4] sm:$0xf]
  %v423 = vld [vmem:[%s3 + $0xa8] sm:$0xf]
  %v424 = vld [vmem:[%s3 + $0xac] sm:$0xf]
  %v425 = vld [vmem:[%s3 + $0xb0] sm:$0xf]
  %v426 = vld [vmem:[%s3 + $0xb4] sm:$0xf]
  %v427 = vld [vmem:[%s3 + $0xb8] sm:$0xf]
  %v428 = vld [vmem:[%s3 + $0xbc] sm:$0xf]
  %v429 = vld [vmem:[%s4] sm:$0x1]
  %v431 = vlaneseq
  %v432 = vshrl.u32 %v431, 7
  %v433 = vsub.s32 0, %v432
  %v434 = vrot.slane %v429, %v433
  %v484 = vunpack.c.l.b16 %v381
  %v485 = vunpack.c.l.b16 %v382
  %v486 = vunpack.c.l.b16 %v383
  %v487 = vunpack.c.l.b16 %v384
  %v488 = vunpack.c.l.b16 %v385
  %v489 = vunpack.c.l.b16 %v386
  %v490 = vunpack.c.l.b16 %v387
  %v491 = vunpack.c.l.b16 %v388
  %v492 = vunpack.c.l.b16 %v389
  %v493 = vunpack.c.l.b16 %v390
  %v494 = vunpack.c.l.b16 %v391
  %v495 = vunpack.c.l.b16 %v392
  %v496 = vunpack.c.l.b16 %v393
  %v497 = vunpack.c.l.b16 %v394
  %v498 = vunpack.c.l.b16 %v395
  %v499 = vunpack.c.l.b16 %v396
  %v500 = vunpack.c.l.b16 %v397
  %v501 = vunpack.c.l.b16 %v398
  %v502 = vunpack.c.l.b16 %v399
  %v503 = vunpack.c.l.b16 %v400
  %v504 = vunpack.c.l.b16 %v401
  %v505 = vunpack.c.l.b16 %v402
  %v506 = vunpack.c.l.b16 %v403
  %v507 = vunpack.c.l.b16 %v404
  %v508 = vunpack.c.l.b16 %v405
  %v509 = vunpack.c.l.b16 %v406
  %v510 = vunpack.c.l.b16 %v407
  %v511 = vunpack.c.l.b16 %v408
  %v512 = vunpack.c.l.b16 %v409
  %v513 = vunpack.c.l.b16 %v410
  %v514 = vunpack.c.l.b16 %v411
  %v515 = vunpack.c.l.b16 %v412
  %v516 = vunpack.c.l.b16 %v413
  %v517 = vunpack.c.l.b16 %v414
  %v518 = vunpack.c.l.b16 %v415
  %v519 = vunpack.c.l.b16 %v416
  %v520 = vunpack.c.l.b16 %v417
  %v521 = vunpack.c.l.b16 %v418
  %v522 = vunpack.c.l.b16 %v419
  %v523 = vunpack.c.l.b16 %v420
  %v524 = vunpack.c.l.b16 %v421
  %v525 = vunpack.c.l.b16 %v422
  %v526 = vunpack.c.l.b16 %v423
  %v527 = vunpack.c.l.b16 %v424
  %v528 = vunpack.c.l.b16 %v425
  %v529 = vunpack.c.l.b16 %v426
  %v530 = vunpack.c.l.b16 %v427
  %v531 = vunpack.c.l.b16 %v428
  %v532 = vpack.c.b16 %v485, %v484
  %v533 = vpack.c.b16 %v487, %v486
  %v534 = vpack.c.b16 %v489, %v488
  %v535 = vpack.c.b16 %v491, %v490
  %v536 = vpack.c.b16 %v493, %v492
  %v537 = vpack.c.b16 %v495, %v494
  %v538 = vpack.c.b16 %v497, %v496
  %v539 = vpack.c.b16 %v499, %v498
  %v540 = vpack.c.b16 %v501, %v500
  %v541 = vpack.c.b16 %v503, %v502
  %v542 = vpack.c.b16 %v505, %v504
  %v543 = vpack.c.b16 %v507, %v506
  %v544 = vpack.c.b16 %v509, %v508
  %v545 = vpack.c.b16 %v511, %v510
  %v546 = vpack.c.b16 %v513, %v512
  %v547 = vpack.c.b16 %v515, %v514
  %v548 = vpack.c.b16 %v517, %v516
  %v549 = vpack.c.b16 %v519, %v518
  %v550 = vpack.c.b16 %v521, %v520
  %v551 = vpack.c.b16 %v523, %v522
  %v552 = vpack.c.b16 %v525, %v524
  %v553 = vpack.c.b16 %v527, %v526
  %v554 = vpack.c.b16 %v529, %v528
  %v555 = vpack.c.b16 %v531, %v530
  %580 = vmatprep.subr.bf16.mxu0 0
  %581 = vmatpush1.bf16.msra.mxu0 %v539
  %582 = vmatprep.subr.bf16.mxu0 0
  %583 = vmatpush1.bf16.msra.mxu0 %v538
  %584 = vmatprep.subr.bf16.mxu0 0
  %585 = vmatpush1.bf16.msra.mxu0 %v537
  %586 = vmatprep.subr.bf16.mxu0 0
  %587 = vmatpush1.bf16.msra.mxu0 %v536
  %588 = vmatprep.subr.bf16.mxu0 0
  %589 = vmatpush1.bf16.msra.mxu0 %v535
  %590 = vmatprep.subr.bf16.mxu0 0
  %591 = vmatpush1.bf16.msra.mxu0 %v534
  %592 = vmatprep.subr.bf16.mxu0 0
  %593 = vmatpush1.bf16.msra.mxu0 %v533
  %594 = vmatprep.subr.bf16.mxu0 0
  %595 = vmatpush1.bf16.msra.mxu0 %v532
  %596 = vmatprep.subr.bf16.mxu0 0
  %597 = vmatpush2.bf16.msra.mxu0 %v547
  %598 = vmatprep.subr.bf16.mxu0 0
  %599 = vmatpush2.bf16.msra.mxu0 %v546
  %600 = vmatprep.subr.bf16.mxu0 0
  %601 = vmatpush2.bf16.msra.mxu0 %v545
  %602 = vmatprep.subr.bf16.mxu0 0
  %603 = vmatpush2.bf16.msra.mxu0 %v544
  %604 = vmatprep.subr.bf16.mxu0 0
  %605 = vmatpush2.bf16.msra.mxu0 %v543
  %606 = vmatprep.subr.bf16.mxu0 0
  %607 = vmatpush2.bf16.msra.mxu0 %v542
  %608 = vmatprep.subr.bf16.mxu0 0
  %609 = vmatpush2.bf16.msra.mxu0 %v541
  %610 = vmatprep.subr.bf16.mxu0 0
  %611 = vmatpush2.bf16.msra.mxu0 %v540
  %612 = vmatprep.mubr.bf16.mxu0 %v379
  %613 = vmatmul.mubr.bf16.gmra.mxu0 %v378
  %v614 = vpop.f32.mrf.mxu0
  %v615 = vadd.f32 %v434, %v614
  %v616 = vpop.f32.mrf.mxu0
  %v617 = vpop.f32.mrf.mxu0
  %v618 = vadd.f32 %v434, %v617
  %v619 = vpop.f32.mrf.mxu0
  %620 = vdwg.mxu0
  %621 = vmatprep.subr.bf16.mxu0 0
  %622 = vmatpush1.bf16.msra.mxu0 %v555
  %623 = vmatprep.subr.bf16.mxu0 0
  %624 = vmatpush1.bf16.msra.mxu0 %v554
  %625 = vmatprep.subr.bf16.mxu0 0
  %626 = vmatpush1.bf16.msra.mxu0 %v553
  %627 = vmatprep.subr.bf16.mxu0 0
  %628 = vmatpush1.bf16.msra.mxu0 %v552
  %629 = vmatprep.subr.bf16.mxu0 0
  %630 = vmatpush1.bf16.msra.mxu0 %v551
  %631 = vmatprep.subr.bf16.mxu0 0
  %632 = vmatpush1.bf16.msra.mxu0 %v550
  %633 = vmatprep.subr.bf16.mxu0 0
  %634 = vmatpush1.bf16.msra.mxu0 %v549
  %635 = vmatprep.subr.bf16.mxu0 0
  %636 = vmatpush1.bf16.msra.mxu0 %v548
  %637 = vmatprep.subr.bf16.mxu0 0
  %638 = vmatpush2.bf16.msra.mxu0 0
  %639 = vmatprep.subr.bf16.mxu0 0
  %640 = vmatpush2.bf16.msra.mxu0 0
  %641 = vmatprep.subr.bf16.mxu0 0
  %642 = vmatpush2.bf16.msra.mxu0 0
  %643 = vmatprep.subr.bf16.mxu0 0
  %644 = vmatpush2.bf16.msra.mxu0 0
  %645 = vmatprep.subr.bf16.mxu0 0
  %646 = vmatpush2.bf16.msra.mxu0 0
  %647 = vmatprep.subr.bf16.mxu0 0
  %648 = vmatpush2.bf16.msra.mxu0 0
  %649 = vmatprep.subr.bf16.mxu0 0
  %650 = vmatpush2.bf16.msra.mxu0 0
  %651 = vmatprep.subr.bf16.mxu0 0
  %652 = vmatpush2.bf16.msra.mxu0 0
  %653 = vmatprep.mubr.bf16.mxu0 0
  %654 = vmatmul.mubr.bf16.gmra.mxu0 %v380
  %v655 = vpop.f32.mrf.mxu0
  %v656 = vadd.f32 %v615, %v655
  %v657 = vpop.f32.mrf.mxu0
  %v658 = vpop.f32.mrf.mxu0
  %v659 = vadd.f32 %v618, %v658
  %v660 = vpop.f32.mrf.mxu0
  %661 = vdwg.mxu0
  %v662 = vadd.f32 %v656, %v21
  %v663 = vadd.f32 %v659, %v22
  %v664 = vmax.f32 %v662, 0.0
  %v665 = vmax.f32 %v663, 0.0
  %v666 = vsub.f32 0.0, %v662
  %v667 = vsub.f32 0.0, %v663
  %vm668 = vcmp.ne.f32.partialorder %v666, %v666
  %vm669 = vcmp.ne.f32.partialorder %v667, %v667
  %v670 = vadd.f32 %v662, 0.0
  %v671 = vadd.f32 %v663, 0.0
  %v672 = vand.u32 2147483647, %v666
  %v673 = vand.u32 2147483647, %v667
  %v674 = vsub.f32 0.0, %v672
  %v675 = vsub.f32 0.0, %v673
  %v676 = vmul.f32 %v674, 1.442695
  %v677 = vpow.pop %v676
  %v678 = vmul.f32 %v675, 1.442695
  %v679 = vpow.pop %v678
  %v680 = vadd.f32 %v677, 1.0
  %v681 = vlog2.pop %v680
  %v682 = vmul.f32 %v681, 0.6931472
  %v683 = vmul.f32 -0.5, %v677
  %v684 = vadd.f32 %v683, 1.0
  %v685 = vmul.f32 %v684, %v677
  %v686 = vand.u32 2147483647, %v677
  %vm687 = vcmp.lt.f32.partialorder %v686, 0.0004427343
  %v688 = vsel %vm687, %v685, %v682
  %v689 = vadd.f32 %v679, 1.0
  %v690 = vlog2.pop %v689
  %v691 = vmul.f32 %v690, 0.6931472
  %v692 = vmul.f32 -0.5, %v679
  %v693 = vadd.f32 %v692, 1.0
  %v694 = vmul.f32 %v693, %v679
  %v695 = vand.u32 2147483647, %v679
  %vm696 = vcmp.lt.f32.partialorder %v695, 0.0004427343
  %v697 = vsel %vm696, %v694, %v691
  %v698 = vadd.f32 %v664, %v688
  %v699 = vadd.f32 %v665, %v697
  %v700 = vsel %vm668, %v670, %v698
  %v701 = vsel %vm669, %v671, %v699
  %702 = vst [vmem:[%s5] sm:$0xff] %v700
  %703 = vst [vmem:[%s5 + $0x8] sm:$0xff] %v701
  // Predicated region
  $region22: #{apply.1} parent=0 // pred_check
    _
  $region23: #{apply.1} parent=0 // pred_check_branch
    %705 = sbr.rel (0) target = $region25
  $region24: #{apply.1} parent=0 // pred_region
    _
  $region25: #{apply.1} parent=0 // pred_fallthru
    _
  // Predicated region
  $region26: #{apply.1} parent=0 // pred_check
    _
  $region27: #{apply.1} parent=0 // pred_check_branch
    %707 = sbr.rel (0) target = $region29
  $region28: #{apply.1} parent=0 // pred_region
    _
  $region29: #{apply.1} parent=0 // pred_fallthru
    _

</llo_original>
